<compile_context>
chip_gen: v7x
topology: tpu7x:2x2x1
jax: 0.10.0
libtpu: 0.0.40
codegen_flags: <defaults>
</compile_context>

<pallas_src>
import jax
import jax.numpy as jnp
from jax.experimental import pallas as pl
from jax.experimental.pallas import tpu as pltpu

NUM_COMPONENTS = 3
INIT_JITTER = 1e-3

_MIB = 1024 * 1024
_TILE_BUDGET_BYTES = 12 * _MIB   # target for double-buffered in + out tiles


def _center_kernel(mrow_ref, d_ref, out_ref):
    """Masked double-centering for a (Bt, L, L) block.

    B = -0.5 * J d2 J on each valid sub-block, zero elsewhere, plus
    init_jitter on the valid diagonal.
    """
    bt, L, _ = d_ref.shape
    mj = (mrow_ref[...] > 0).astype(jnp.float32)            # (Bt, 1, L) col mask
    mi = jnp.swapaxes(mj, 1, 2)                              # (Bt, L, 1) row mask
    d = jnp.clip(d_ref[...].astype(jnp.float32), 0.0, 100.0)  # (Bt, L, L)

    n = jnp.sum(mj, axis=2, keepdims=True)                   # (Bt, 1, 1)
    n_safe = jnp.maximum(n, 1.0)

    d2 = (d * d + 1e-6) * mi * mj                            # masked d^2 + eps
    # NOTE: col_sum is kept as an independent axis=1 reduction (not row_sum.T)
    # so non-symmetric distance maps keep the reference semantics.
    row_sum = jnp.sum(d2, axis=2, keepdims=True)             # (Bt, L, 1)
    col_sum = jnp.sum(d2, axis=1, keepdims=True)             # (Bt, 1, L)
    tot = jnp.sum(d2, axis=(1, 2), keepdims=True)            # (Bt, 1, 1)

    b = -0.5 * (d2 - row_sum / n_safe - col_sum / n_safe + tot / (n_safe * n_safe))

    eye = (jax.lax.broadcasted_iota(jnp.int32, (L, L), 0)
           == jax.lax.broadcasted_iota(jnp.int32, (L, L), 1)).astype(jnp.float32)
    out_ref[...] = (b + INIT_JITTER * eye[None, :, :]) * mi * mj


def _pick_batch_tile(B, L, in_itemsize, tile_budget_bytes):
    """Largest batch tile whose double-buffered (dist in + f32 gram out) tiles
    fit the budget, divides B exactly, and keeps >= 2 grid steps (v7x)."""
    per_b = 2 * L * L * (in_itemsize + 4)
    bt = max(1, tile_budget_bytes // per_b)
    if B >= 2:
        bt = min(bt, -(-B // 2))   # keep grid >= 2 so both v7x TCs get work
    bt = max(1, min(bt, B))
    while B % bt:
        bt -= 1
    return bt


def differentiable_mds(dist_map, mask, num_components=NUM_COMPONENTS,
                       donate_dist_map=False):
    B, L, _ = dist_map.shape
    in_itemsize = jnp.dtype(dist_map.dtype).itemsize
    mask_row = mask.reshape(B, 1, L)

    # TODO(synk): for very large L (e.g. L >= 2048 f32 on v7x's 64 MiB VMEM)
    # this needs row-tiled centering with precomputed row/col sums.
    bt = _pick_batch_tile(B, L, in_itemsize, _TILE_BUDGET_BYTES)
    tile_bytes = 2 * bt * (L * L * (in_itemsize + 4)
                           + L * jnp.dtype(mask_row.dtype).itemsize)
    vmem_limit = int(min(48 * _MIB, max(3 * tile_bytes, 16 * _MIB)))

    alias = {}
    if donate_dist_map and dist_map.dtype == jnp.float32:
        # Reuse the dist_map HBM buffer for the Gram matrix (only valid if the
        # caller no longer needs dist_map).
        alias = {"input_output_aliases": {1: 0}}

    b_mat = pl.pallas_call(
        _center_kernel,
        out_shape=jax.ShapeDtypeStruct((B, L, L), jnp.float32),
        grid=(B // bt,),
        in_specs=[
            pl.BlockSpec((bt, 1, L), lambda b: (b, 0, 0)),
            pl.BlockSpec((bt, L, L), lambda b: (b, 0, 0)),
        ],
        out_specs=pl.BlockSpec((bt, L, L), lambda b: (b, 0, 0)),
        compiler_params=pltpu.CompilerParams(
            dimension_semantics=("parallel",),
            vmem_limit_bytes=vmem_limit),
        **alias,
    )(mask_row, dist_map)

    # TODO(synk): symmetric eigendecomposition has no Pallas TPU primitive and
    # dominates wall clock for large L; a top-(K+p) MXU subspace iteration
    # would replace it, but exact eigh is kept to preserve reference semantics.
    e, v = jnp.linalg.eigh(b_mat)                            # (B, L), (B, L, L)
    e_top = e[:, -num_components:]                           # (B, K)
    v_top = v[:, :, -num_components:]                        # (B, L, K)

    # Embedding + scatter-back-to-full done in plain JAX (O(B*L*K) elementwise,
    # last dim = 3 would waste 125/128 lanes as a Pallas store).
    scale = jnp.sqrt(jnp.maximum(e_top, 0.0))                # (B, K)
    valid = (mask > 0).astype(jnp.float32).reshape(B, L, 1)  # (B, L, 1)
    x = v_top * scale[:, None, :] * valid
    return x.astype(jnp.float32)


if __name__ == "__main__":
    key = jax.random.PRNGKey(0)
    k1, k2 = jax.random.split(key)
    B, L = 2, 16

    # Build a plausible symmetric distance map from random 3-D points.
    coords = jax.random.normal(k1, (B, L, 3), dtype=jnp.float32) * 3.0
    diff = coords[:, :, None, :] - coords[:, None, :, :]
    dist_map = jnp.sqrt(jnp.sum(diff * diff, axis=-1) + 1e-9)     # (B, L, L)

    # Binary mask with some invalid positions; guarantee >=1 valid per batch.
    mask = (jax.random.uniform(k2, (B, L)) > 0.25).astype(jnp.float32)
    mask = mask.at[:, 0].set(1.0)

    out = differentiable_mds(dist_map, mask)
    jax.block_until_ready(out)
    assert out.shape == (B, L, NUM_COMPONENTS)
    assert out.dtype == jnp.float32
    assert bool(jnp.all(jnp.isfinite(out)))
    print("KERNEL_OK")
</pallas_src>

<mosaic_0001>
module attributes {stable_mosaic.version = 11 : i64} {
  func.func @_center_kernel(%arg0: i32, %arg1: memref<1x1x16xf32, #tpu.memory_space<vmem>>, %arg2: memref<1x16x16xf32, #tpu.memory_space<vmem>>, %arg3: memref<1x16x16xf32, #tpu.memory_space<vmem>>) attributes {dimension_semantics = [#tpu.dimension_semantics<parallel>], iteration_bounds = array<i64: 2>, scalar_prefetch = 0 : i64, scratch_operands = 0 : i64, tpu.core_type = #tpu.core_type<tc>, window_params = [{transform_indices = @transform_0, window_bounds = array<i64: 1, 1, 16>}, {transform_indices = @transform_1, window_bounds = array<i64: 1, 16, 16>}, {transform_indices = @transform_2, window_bounds = array<i64: 1, 16, 16>}]} {
    %c0 = arith.constant 0 : index
    %c0_0 = arith.constant 0 : index
    %c0_1 = arith.constant 0 : index
    %0 = vector.load %arg1[%c0, %c0_0, %c0_1] : memref<1x1x16xf32, #tpu.memory_space<vmem>>, vector<1x1x16xf32>
    %cst = arith.constant 0.000000e+00 : f32
    %1 = vector.broadcast %cst : f32 to vector<1x1x16xf32>
    %2 = arith.cmpf ogt, %0, %1 : vector<1x1x16xf32>
    %3 = arith.extui %2 : vector<1x1x16xi1> to vector<1x1x16xi32>
    %4 = arith.sitofp %3 : vector<1x1x16xi32> to vector<1x1x16xf32>
    %5 = tpu.transpose %4, [0, 2, 1] : vector<1x1x16xf32> -> vector<1x16x1xf32>
    %c0_2 = arith.constant 0 : index
    %c0_3 = arith.constant 0 : index
    %c0_4 = arith.constant 0 : index
    %6 = vector.load %arg2[%c0_2, %c0_3, %c0_4] : memref<1x16x16xf32, #tpu.memory_space<vmem>>, vector<1x16x16xf32>
    %cst_5 = arith.constant 0.000000e+00 : f32
    %cst_6 = arith.constant 1.000000e+02 : f32
    %7 = vector.broadcast %cst_5 : f32 to vector<1x16x16xf32>
    %8 = arith.maximumf %7, %6 : vector<1x16x16xf32>
    %9 = vector.broadcast %cst_6 : f32 to vector<1x16x16xf32>
    %10 = arith.minimumf %9, %8 : vector<1x16x16xf32>
    %cst_7 = arith.constant dense<0.000000e+00> : vector<1x1xf32>
    %11 = vector.multi_reduction <add>, %4, %cst_7 [2] : vector<1x1x16xf32> to vector<1x1xf32>
    %12 = vector.shape_cast %11 : vector<1x1xf32> to vector<1x1x1xf32>
    %cst_8 = arith.constant 1.000000e+00 : f32
    %13 = vector.broadcast %cst_8 : f32 to vector<1x1x1xf32>
    %14 = arith.maximumf %12, %13 : vector<1x1x1xf32>
    %15 = arith.mulf %10, %10 : vector<1x16x16xf32>
    %cst_9 = arith.constant 9.99999997E-7 : f32
    %16 = vector.broadcast %cst_9 : f32 to vector<1x16x16xf32>
    %17 = arith.addf %15, %16 : vector<1x16x16xf32>
    %18 = vector.broadcast %5 : vector<1x16x1xf32> to vector<1x16x16xf32>
    %19 = arith.mulf %17, %18 : vector<1x16x16xf32>
    %20 = vector.broadcast %4 : vector<1x1x16xf32> to vector<1x16x16xf32>
    %21 = arith.mulf %19, %20 : vector<1x16x16xf32>
    %cst_10 = arith.constant dense<0.000000e+00> : vector<1x16xf32>
    %22 = vector.multi_reduction <add>, %21, %cst_10 [2] : vector<1x16x16xf32> to vector<1x16xf32>
    %23 = vector.shape_cast %22 : vector<1x16xf32> to vector<1x16x1xf32>
    %cst_11 = arith.constant dense<0.000000e+00> : vector<1x16xf32>
    %24 = vector.multi_reduction <add>, %21, %cst_11 [1] : vector<1x16x16xf32> to vector<1x16xf32>
    %25 = vector.shape_cast %24 : vector<1x16xf32> to vector<1x1x16xf32>
    %cst_12 = arith.constant dense<0.000000e+00> : vector<1xf32>
    %26 = vector.multi_reduction <add>, %21, %cst_12 [1, 2] : vector<1x16x16xf32> to vector<1xf32>
    %27 = vector.shape_cast %26 : vector<1xf32> to vector<1x1x1xf32>
    %28 = vector.broadcast %14 : vector<1x1x1xf32> to vector<1x16x1xf32>
    %29 = arith.divf %23, %28 : vector<1x16x1xf32>
    %30 = vector.broadcast %29 : vector<1x16x1xf32> to vector<1x16x16xf32>
    %31 = arith.subf %21, %30 : vector<1x16x16xf32>
    %32 = vector.broadcast %14 : vector<1x1x1xf32> to vector<1x1x16xf32>
    %33 = arith.divf %25, %32 : vector<1x1x16xf32>
    %34 = vector.broadcast %33 : vector<1x1x16xf32> to vector<1x16x16xf32>
    %35 = arith.subf %31, %34 : vector<1x16x16xf32>
    %36 = arith.mulf %14, %14 : vector<1x1x1xf32>
    %37 = arith.divf %27, %36 : vector<1x1x1xf32>
    %38 = vector.broadcast %37 : vector<1x1x1xf32> to vector<1x16x16xf32>
    %39 = arith.addf %35, %38 : vector<1x16x16xf32>
    %cst_13 = arith.constant -5.000000e-01 : f32
    %40 = vector.broadcast %cst_13 : f32 to vector<1x16x16xf32>
    %41 = arith.mulf %40, %39 : vector<1x16x16xf32>
    %42 = tpu.iota {dimensions = array<i32: 0>} : vector<16x16xi32>
    %43 = tpu.iota {dimensions = array<i32: 1>} : vector<16x16xi32>
    %44 = arith.cmpi eq, %42, %43 : vector<16x16xi32>
    %45 = arith.extui %44 : vector<16x16xi1> to vector<16x16xi32>
    %46 = arith.sitofp %45 : vector<16x16xi32> to vector<16x16xf32>
    %47 = vector.shape_cast %46 : vector<16x16xf32> to vector<1x16x16xf32>
    %cst_14 = arith.constant 1.000000e-03 : f32
    %48 = vector.broadcast %cst_14 : f32 to vector<1x16x16xf32>
    %49 = arith.mulf %48, %47 : vector<1x16x16xf32>
    %50 = arith.addf %41, %49 : vector<1x16x16xf32>
    %51 = vector.broadcast %5 : vector<1x16x1xf32> to vector<1x16x16xf32>
    %52 = arith.mulf %50, %51 : vector<1x16x16xf32>
    %53 = vector.broadcast %4 : vector<1x1x16xf32> to vector<1x16x16xf32>
    %54 = arith.mulf %52, %53 : vector<1x16x16xf32>
    %c0_15 = arith.constant 0 : index
    %c0_16 = arith.constant 0 : index
    %c0_17 = arith.constant 0 : index
    %55 = vector.load %arg3[%c0_15, %c0_16, %c0_17] : memref<1x16x16xf32, #tpu.memory_space<vmem>>, vector<1x16x16xf32>
    tpu.vector_store %arg3[%c0_15, %c0_16, %c0_17], %54 {strides = array<i32>} : memref<1x16x16xf32, #tpu.memory_space<vmem>>, vector<1x16x16xf32>,
    return
  }
  func.func @transform_0(%arg0: i32) -> (i32, i32, i32) {
    %c0_i32 = arith.constant 0 : i32
    %c0_i32_0 = arith.constant 0 : i32
    %c0_i32_1 = arith.constant 0 : i32
    return %arg0, %c0_i32, %c0_i32_0 : i32, i32, i32
  }
  func.func @transform_1(%arg0: i32) -> (i32, i32, i32) {
    %c0_i32 = arith.constant 0 : i32
    %c0_i32_0 = arith.constant 0 : i32
    %c0_i32_1 = arith.constant 0 : i32
    return %arg0, %c0_i32, %c0_i32_0 : i32, i32, i32
  }
  func.func @transform_2(%arg0: i32) -> (i32, i32, i32) {
    %c0_i32 = arith.constant 0 : i32
    %c0_i32_0 = arith.constant 0 : i32
    %c0_i32_1 = arith.constant 0 : i32
    return %arg0, %c0_i32, %c0_i32_0 : i32, i32, i32
  }
}

</mosaic_0001>

<llo_original>
// kernel: tpu_custom_call.1
$region0: #{tpu_custom_call.1}
  #allocation0 [shape = 'u32[]', space=smem, size = 0x4, offset = 0x4, fixed_abs, tag = 'smem constant byte address 0x4 - core index']
  #allocation1 [shape = 'u32[144,128]{1,0:T(1,128)}', space=vmem, size = 0x12000, scoped, tag = 'internal scratch']
  %s0 = inlined_call_operand.hbm [shape: f32[2,1,16], index: 0, kind: input, shape index: {}]
  %s1 = inlined_call_operand.hbm [shape: f32[2,16,16], index: 1, kind: input, shape index: {}]
  %s2 = inlined_call_operand.hbm [shape: f32[2,16,16], index: 2, kind: output, shape index: {}]
  %s3 = sld [smem:[#allocation0]]
  $region49: #{tpu_custom_call.1} parent=0
    _
  %s5 = ssub.s32 1, %s3
  %s6 = scalar_select 0, %s5, %s3
  $region1: #{tpu_custom_call.1} parent=0
    #allocation2 [shape = 'u8[1024]{0}', space=vmem, size = 0x400, scoped, tag = 'input window, operand 0']
    #allocation3 [shape = 's32[2]{0}', space=sflag, size = 0x8, scoped, tag = 'scoped memory for tpu_custom_call.1']
    #allocation4 [shape = 's32[2]{0}', space=sflag, size = 0x8, scoped, tag = 'scoped memory for tpu_custom_call.1']
    #allocation5 [shape = 'u8[16384]{0}', space=vmem, size = 0x4000, scoped, tag = 'input window, operand 1']
    #allocation6 [shape = 's32[2]{0}', space=sflag, size = 0x8, scoped, tag = 'scoped memory for tpu_custom_call.1']
    #allocation7 [shape = 'u8[16384]{0}', space=vmem, size = 0x4000, scoped, tag = 'output window, operand 0']
    %7 = vsyncpa [#allocation3], 0
    %s8 = scalar_lea.sflag [#allocation3], 1
    %9 = vsyncpa %s8, 0
    %10 = vsyncpa [#allocation6], 0
    %s11 = scalar_lea.sflag [#allocation6], 1
    %12 = vsyncpa %s11, 0
    %13 = vsyncpa [#allocation4], 0
    %s14 = scalar_lea.sflag [#allocation4], 1
    %15 = vsyncpa %s14, 0
    loop: start=0, step=1, limit=4
    $region2: #{tpu_custom_call.1} parent=1 // loop_pre_header
      _
    $region3: #{tpu_custom_call.1} parent=1 // loop_header
      %s17 = sphi 0, %s21
      %p18 = scmp.ge.s32.totalorder %s17, 4
      %s27 = sphi 0, %s29
      %s30 = sphi 0, %s27
      %s31 = sphi 0, %s30
      %s47 = sphi 0, %s31
      %s53 = sphi 0, %s55
      %s56 = sphi 0, %s53
      %s57 = sphi 0, %s56
      %s73 = sphi 0, %s57
      %s79 = sphi 0, %s81
      %s82 = sphi 0, %s79
      %s83 = sphi 0, %s82
      %s99 = sphi 0, %s83
    $region4: #{tpu_custom_call.1} parent=1 // loop_header_branch
      %20 = sbr.rel (%p18) target = $region8
    $region5: #{tpu_custom_call.1} parent=1 // loop_body
      %s22 = ssub.s32 %s17, 1
      %s23 = ssub.s32 %s17, 2
      %s24 = sadd.s32 %s17, 1
      %s25 = ssub.s32 %s17, %s24
      %p26 = scmp.eq.s32.totalorder %s25, 0
      %s28 = sadd.s32 %s27, 1
      %s29 = scalar_select %p26, %s27, %s28
      %p32 = pneg %p26
      %p33 = scmp.eq.s32.totalorder %s17, 1
      %p34 = por %p32, %p33
      %p35 = scmp.ne.s32.totalorder %s27, %s30
      %p36 = scmp.eq.s32.totalorder %s17, 0
      %p37 = por %p35, %p36
      %p38 = scmp.ne.s32.totalorder %s27, %s30
      %p39 = scmp.eq.s32.totalorder %s22, 1
      %p40 = por %p38, %p39
      %p41 = scmp.ne.s32.totalorder %s30, %s31
      %p42 = scmp.eq.s32.totalorder %s22, 0
      %p43 = por %p41, %p42
      %p44 = scmp.ne.s32.totalorder %s30, %s31
      %p45 = scmp.eq.s32.totalorder %s23, 1
      %p46 = por %p44, %p45
      %p48 = scmp.ne.s32.totalorder %s31, %s47
      %p49 = scmp.eq.s32.totalorder %s23, 0
      %p50 = por %p48, %p49
      %s51 = ssub.s32 %s17, %s24
      %p52 = scmp.eq.s32.totalorder %s51, 0
      %s54 = sadd.s32 %s53, 1
      %s55 = scalar_select %p52, %s53, %s54
      %p58 = pneg %p52
      %p59 = scmp.eq.s32.totalorder %s17, 1
      %p60 = por %p58, %p59
      %p61 = scmp.ne.s32.totalorder %s53, %s56
      %p62 = scmp.eq.s32.totalorder %s17, 0
      %p63 = por %p61, %p62
      %p64 = scmp.ne.s32.totalorder %s53, %s56
      %p65 = scmp.eq.s32.totalorder %s22, 1
      %p66 = por %p64, %p65
      %p67 = scmp.ne.s32.totalorder %s56, %s57
      %p68 = scmp.eq.s32.totalorder %s22, 0
      %p69 = por %p67, %p68
      %p70 = scmp.ne.s32.totalorder %s56, %s57
      %p71 = scmp.eq.s32.totalorder %s23, 1
      %p72 = por %p70, %p71
      %p74 = scmp.ne.s32.totalorder %s57, %s73
      %p75 = scmp.eq.s32.totalorder %s23, 0
      %p76 = por %p74, %p75
      %s77 = ssub.s32 %s17, %s24
      %p78 = scmp.eq.s32.totalorder %s77, 0
      %s80 = sadd.s32 %s79, 1
      %s81 = scalar_select %p78, %s79, %s80
      %p84 = pneg %p78
      %p85 = scmp.eq.s32.totalorder %s17, 1
      %p86 = por %p84, %p85
      %p87 = scmp.ne.s32.totalorder %s79, %s82
      %p88 = scmp.eq.s32.totalorder %s17, 0
      %p89 = por %p87, %p88
      %p90 = scmp.ne.s32.totalorder %s79, %s82
      %p91 = scmp.eq.s32.totalorder %s22, 1
      %p92 = por %p90, %p91
      %p93 = scmp.ne.s32.totalorder %s82, %s83
      %p94 = scmp.eq.s32.totalorder %s22, 0
      %p95 = por %p93, %p94
      %p96 = scmp.ne.s32.totalorder %s82, %s83
      %p97 = scmp.eq.s32.totalorder %s23, 1
      %p98 = por %p96, %p97
      %p100 = scmp.ne.s32.totalorder %s83, %s99
      %p101 = scmp.eq.s32.totalorder %s23, 0
      %p102 = por %p100, %p101
      %p103 = scmp.le.s32.totalorder 1, %s17
      %p104 = scmp.lt.s32.totalorder %s17, 3
      %p105 = pnand %p103, %p104
      %p106 = pneg %p105
      // Predicated region
      $region9: #{tpu_custom_call.1} parent=5 // pred_check
        _
      $region10: #{tpu_custom_call.1} parent=5 // pred_check_branch
        %108 = sbr.rel (%p105) target = $region12
      $region11: #{tpu_custom_call.1} parent=5 // pred_region
        %s109 = ssub.s32 %s17, 1
      $region12: #{tpu_custom_call.1} parent=5 // pred_fallthru
        _
      %p110 = scmp.lt.s32.totalorder %s17, 2
      // Predicated region
      $region13: #{tpu_custom_call.1} parent=5 // pred_check
        %p111 = pneg %p110
      $region14: #{tpu_custom_call.1} parent=5 // pred_check_branch
        %113 = sbr.rel (%p111) target = $region16
      $region15: #{tpu_custom_call.1} parent=5 // pred_region
        // Predicated region
        $region17: #{tpu_custom_call.1} parent=15 // pred_check
          %p114 = pneg %p37
        $region18: #{tpu_custom_call.1} parent=15 // pred_check_branch
          %116 = sbr.rel (%p114) target = $region20
        $region19: #{tpu_custom_call.1} parent=15 // pred_region
          %s117 = sand.u32 %s27, 1
          %s118 = scalar_lea.sflag [#allocation3], %s117
          %s119 = sand.u32 %s27, 1
          %s120 = scalar_lea.vmem [#allocation2], %s119
          %s122 = ssub.s32 16, 16
          %123 = vsyncadd %s118, %s122
          %s124 = smul.addr %s17, 16
          %s125 = scalar_lea.hbm %s0, %s124
          %s127 = sshll.u32 %s120, 4
          %s128 = int_to_ptr.vmem [resolvable:$true] %s127
          %130 = dma.hbm_to_vmem [thread:$0]  %s125, 16, %s128, %s118
        $region20: #{tpu_custom_call.1} parent=15 // pred_fallthru
          _
        // Predicated region
        $region21: #{tpu_custom_call.1} parent=15 // pred_check
          %p131 = pneg %p63
        $region22: #{tpu_custom_call.1} parent=15 // pred_check_branch
          %133 = sbr.rel (%p131) target = $region24
        $region23: #{tpu_custom_call.1} parent=15 // pred_region
          %s134 = sand.u32 %s53, 1
          %s135 = scalar_lea.sflag [#allocation6], %s134
          %s136 = sand.u32 %s53, 1
          %s137 = smul.addr %s136, 16
          %s138 = scalar_lea.vmem [#allocation5], %s137
          %s140 = ssub.s32 256, 256
          %141 = vsyncadd %s135, %s140
          %s142 = smul.addr %s17, 2
          %s143 = smul.addr %s142, 128
          %s144 = scalar_lea.hbm %s1, %s143
          %s145 = sshll.u32 %s138, 4
          %s146 = int_to_ptr.vmem [resolvable:$true] %s145
          %151 = dma.hbm_to_vmem [thread:$0]  %s144, 256, %s146, %s135, 128, 128, 8
        $region24: #{tpu_custom_call.1} parent=15 // pred_fallthru
          _
      $region16: #{tpu_custom_call.1} parent=5 // pred_fallthru
        _
      %p152 = scmp.le.s32.totalorder 1, %s17
      %p153 = scmp.lt.s32.totalorder %s17, 3
      %p154 = pnand %p152, %p153
      %p155 = pneg %p154
      // Predicated region
      $region25: #{tpu_custom_call.1} parent=5 // pred_check
        _
      $region26: #{tpu_custom_call.1} parent=5 // pred_check_branch
        %157 = sbr.rel (%p154) target = $region28
      $region27: #{tpu_custom_call.1} parent=5 // pred_region
        %s158 = ssub.s32 %s17, 1
        %s159 = sand.u32 %s30, 1
        %s160 = scalar_lea.sflag [#allocation3], %s159
        %s161 = sand.u32 %s30, 1
        %s162 = scalar_lea.vmem [#allocation2], %s161
        // Predicated region
        $region29: #{tpu_custom_call.1} parent=27 // pred_check
          %p163 = pneg %p43
        $region30: #{tpu_custom_call.1} parent=27 // pred_check_branch
          %165 = sbr.rel (%p163) target = $region32
        $region31: #{tpu_custom_call.1} parent=27 // pred_region
          %166 = dma.done %s160, 16
        $region32: #{tpu_custom_call.1} parent=27 // pred_fallthru
          _
        %s167 = sand.u32 %s56, 1
        %s168 = scalar_lea.sflag [#allocation6], %s167
        %s169 = sand.u32 %s56, 1
        %s170 = smul.addr %s169, 16
        %s171 = scalar_lea.vmem [#allocation5], %s170
        // Predicated region
        $region33: #{tpu_custom_call.1} parent=27 // pred_check
          %p172 = pneg %p69
        $region34: #{tpu_custom_call.1} parent=27 // pred_check_branch
          %174 = sbr.rel (%p172) target = $region36
        $region35: #{tpu_custom_call.1} parent=27 // pred_region
          %175 = dma.done %s168, 256
        $region36: #{tpu_custom_call.1} parent=27 // pred_fallthru
          _
        %s176 = sand.u32 %s30, 1
        %s177 = scalar_lea.sflag [#allocation3], %s176
        %s178 = sand.u32 %s30, 1
        %s179 = scalar_lea.vmem [#allocation2], %s178
        %p180 = pneg %p43
        %p181 = pneg %p40
        %s182 = sand.u32 %s56, 1
        %s183 = scalar_lea.sflag [#allocation6], %s182
        %s184 = sand.u32 %s56, 1
        %s185 = smul.addr %s184, 16
        %s186 = scalar_lea.vmem [#allocation5], %s185
        %p187 = pneg %p69
        %p188 = pneg %p66
        %p189 = pneg %p95
        %p190 = pneg %p92
        %s191 = sand.u32 %s82, 1
        %s192 = scalar_lea.sflag [#allocation4], %s191
        %s193 = sand.u32 %s82, 1
        %s194 = smul.addr %s193, 16
        %s195 = scalar_lea.vmem [#allocation7], %s194
        %v196 = vld [vmem:[%s162] sm:$0x1]
        %vm197 = vcmp.gt.f32.partialorder %v196, 0.0
        %v198 = vsel %vm197, 1, 0
        %v199 = vcvt.s32.f32 %v198
        %200 = vxpose.xlu0.b32.start [1/16] %v199, 128
        %201 = vxpose.xlu0.b32.cont [2/16] 0.0, 128
        %202 = vxpose.xlu0.b32.cont [3/16] 0.0, 128
        %203 = vxpose.xlu0.b32.cont [4/16] 0.0, 128
        %204 = vxpose.xlu0.b32.cont [5/16] 0.0, 128
        %205 = vxpose.xlu0.b32.cont [6/16] 0.0, 128
        %206 = vxpose.xlu0.b32.cont [7/16] 0.0, 128
        %207 = vxpose.xlu0.b32.cont [8/16] 0.0, 128
        %208 = vxpose.xlu0.b32.cont [9/16] 0.0, 128
        %209 = vxpose.xlu0.b32.cont [10/16] 0.0, 128
        %210 = vxpose.xlu0.b32.cont [11/16] 0.0, 128
        %211 = vxpose.xlu0.b32.cont [12/16] 0.0, 128
        %212 = vxpose.xlu0.b32.cont [13/16] 0.0, 128
        %213 = vxpose.xlu0.b32.cont [14/16] 0.0, 128
        %214 = vxpose.xlu0.b32.cont [15/16] 0.0, 128
        %215 = vxpose.xlu0.b32.end [16/16] 0.0, 128
        %v216 = vpop.trf.xlu0
        %v217 = vpop.trf.xlu0
        %v218 = vpop.trf.xlu0
        %v219 = vpop.trf.xlu0
        %v220 = vpop.trf.xlu0
        %v221 = vpop.trf.xlu0
        %v222 = vpop.trf.xlu0
        %v223 = vpop.trf.xlu0
        %v224 = vpop.trf.xlu0
        %v225 = vpop.trf.xlu0
        %v226 = vpop.trf.xlu0
        %v227 = vpop.trf.xlu0
        %v228 = vpop.trf.xlu0
        %v229 = vpop.trf.xlu0
        %v230 = vpop.trf.xlu0
        %v231 = vpop.trf.xlu0
        %v232 = vld [vmem:[%s171] sm:$0xff]
        %v233 = vld [vmem:[%s171 + $0x8] sm:$0xff]
        %v234 = vmax.f32 %v232, 0.0
        %v235 = vmax.f32 %v233, 0.0
        %v236 = vmin.f32 %v234, 100.0
        %v237 = vmin.f32 %v235, 100.0
        %vm238 = vcmask 122880
        %v239 = vsel %vm238, %v199, 0.0
        %240 = vadd.xlane.f32.xlu0 %v239
        %v241 = vpop.xlane.xlu0 %240
        %v242 = vmax.f32 %v241, 1.0
        %v243 = vmul.f32 %v236, %v236
        %v244 = vmul.f32 %v237, %v237
        %v245 = vadd.f32 %v243, 1e-06
        %v246 = vadd.f32 %v244, 1e-06
        %248 = vset.pattern.permute.xlu0 0
        %249 = vperm.xlu0 %248, %v216
        %v250 = vpop.permute.xlu0 %249
        %253 = vset.pattern.permute.xlu0 0
        %254 = vperm.xlu0 %253, %v217
        %v255 = vpop.permute.xlu0 %254
        %v257 = vmul.f32 %v245, %v250
        %v258 = vmul.f32 %v246, %v255
        %v260 = vlaneseq
        %v261 = vshrl.u32 %v260, 7
        %v262 = vsub.s32 0, %v261
        %v263 = vrot.slane %v199, %v262
        %v265 = vmul.f32 %v257, %v263
        %v266 = vmul.f32 %v258, %v263
        %vm267 = vcmask 130048
        %v268 = vsel %vm267, %v265, 0.0
        %269 = vadd.xlane.f32.xlu0 %v268
        %v270 = vpop.xlane.xlu0 %269
        %v271 = vsel %vm267, %v266, 0.0
        %272 = vadd.xlane.f32.xlu0 %v271
        %v273 = vpop.xlane.xlu0 %272
        %v274 = vadd.f32 %v268, %v271
        %v275 = vrot.slane %v274, 4
        %v276 = vadd.f32 %v274, %v275
        %v277 = vrot.slane %v276, 2
        %v278 = vadd.f32 %v276, %v277
        %v279 = vrot.slane %v278, 1
        %v280 = vadd.f32 %v278, %v279
        %281 = vadd.xlane.f32.xlu0 %v274
        %v282 = vpop.xlane.xlu0 %281
        %v283 = vrot.slane %v282, 4
        %v284 = vadd.f32 %v282, %v283
        %v285 = vrot.slane %v284, 2
        %v286 = vadd.f32 %v284, %v285
        %v287 = vrot.slane %v286, 1
        %v288 = vadd.f32 %v286, %v287
        %v289 = vlaneseq
        %v290 = vshrl.u32 %v289, 7
        %v291 = vsub.s32 0, %v290
        %v292 = vrot.slane %v242, %v291
        %v293 = vrcp.pop %v292
        %v294 = vmul.f32 %v270, %v293
        %v295 = vmul.f32 %v273, %v293
        %v296 = vsub.f32 %v265, %v294
        %v297 = vsub.f32 %v266, %v295
        %v298 = vrcp.pop %v242
        %v299 = vmul.f32 %v280, %v298
        %v300 = vlaneseq
        %v301 = vshrl.u32 %v300, 7
        %v302 = vsub.s32 0, %v301
        %v303 = vrot.slane %v299, %v302
        %v304 = vsub.f32 %v296, %v303
        %v305 = vsub.f32 %v297, %v303
        %v306 = vmul.f32 %v242, %v242
        %v307 = vrcp.pop %v306
        %v308 = vmul.f32 %v288, %v307
        %v309 = vlaneseq
        %v310 = vshrl.u32 %v309, 7
        %v311 = vsub.s32 0, %v310
        %v312 = vrot.slane %v308, %v311
        %v313 = vadd.f32 %v304, %v312
        %v314 = vadd.f32 %v305, %v312
        %v315 = vmul.f32 %v313, -0.5
        %v316 = vmul.f32 %v314, -0.5
        %v317 = vlaneseq
        %v318 = vshrl.u32 %v317, 7
        %v319 = vadd.s32 %v318, 8
        %v320 = vlaneseq
        %v321 = vand.u32 %v320, 127
        %vm322 = vcmp.eq.s32.totalorder %v318, %v321
        %vm323 = vcmp.eq.s32.totalorder %v319, %v321
        %v324 = vsel %vm322, 1, 0
        %v325 = vsel %vm323, 1, 0
        %v326 = vcvt.s32.f32 %v324
        %v327 = vcvt.s32.f32 %v325
        %v328 = vmul.f32 %v326, 0.001
        %v329 = vmul.f32 %v327, 0.001
        %v330 = vadd.f32 %v315, %v328
        %v331 = vadd.f32 %v316, %v329
        %v332 = vmul.f32 %v330, %v250
        %v333 = vmul.f32 %v331, %v255
        %v334 = vmul.f32 %v332, %v263
        %v335 = vmul.f32 %v333, %v263
        %336 = vst.msk [vmem:[%s195] sm:$0xff] %vm267, %v334
        %337 = vst.msk [vmem:[%s195 + $0x8] sm:$0xff] %vm267, %v335
        %s338 = sand.u32 %s82, 1
        %s339 = scalar_lea.sflag [#allocation4], %s338
        %s340 = sand.u32 %s82, 1
        %s341 = smul.addr %s340, 16
        %s342 = scalar_lea.vmem [#allocation7], %s341
        // Predicated region
        $region37: #{tpu_custom_call.1} parent=27 // pred_check
          %p343 = pneg %p92
        $region38: #{tpu_custom_call.1} parent=27 // pred_check_branch
          %345 = sbr.rel (%p343) target = $region40
        $region39: #{tpu_custom_call.1} parent=27 // pred_region
          %s347 = ssub.s32 256, 256
          %348 = vsyncadd %s339, %s347
          %s349 = smul.addr %s22, 2
          %s350 = smul.addr %s349, 128
          %s351 = scalar_lea.hbm %s2, %s350
          %s352 = sshll.u32 %s342, 4
          %s353 = int_to_ptr.vmem [resolvable:$true] %s352
          %358 = dma.vmem_to_hbm [thread:$0]  %s353, 256, %s351, %s339, 128, 128, 8
        $region40: #{tpu_custom_call.1} parent=27 // pred_fallthru
          _
      $region28: #{tpu_custom_call.1} parent=5 // pred_fallthru
        _
      %p359 = scmp.le.s32.totalorder 2, %s17
      // Predicated region
      $region41: #{tpu_custom_call.1} parent=5 // pred_check
        %p360 = pneg %p359
      $region42: #{tpu_custom_call.1} parent=5 // pred_check_branch
        %362 = sbr.rel (%p360) target = $region44
      $region43: #{tpu_custom_call.1} parent=5 // pred_region
        %s363 = ssub.s32 %s17, 2
        // Predicated region
        $region45: #{tpu_custom_call.1} parent=43 // pred_check
          %p364 = pneg %p98
        $region46: #{tpu_custom_call.1} parent=43 // pred_check_branch
          %366 = sbr.rel (%p364) target = $region48
        $region47: #{tpu_custom_call.1} parent=43 // pred_region
          %s367 = sand.u32 %s83, 1
          %s368 = scalar_lea.sflag [#allocation4], %s367
          %s369 = sand.u32 %s83, 1
          %s370 = smul.addr %s369, 16
          %s371 = scalar_lea.vmem [#allocation7], %s370
          %372 = dma.done %s368, 256
        $region48: #{tpu_custom_call.1} parent=43 // pred_fallthru
          _
      $region44: #{tpu_custom_call.1} parent=5 // pred_fallthru
        _
    $region6: #{tpu_custom_call.1} parent=1 // loop_footer
      %s21 = sadd.s32 1, %s17
    $region7: #{tpu_custom_call.1} parent=1 // loop_footer_branch
      %16 = sbr.rel target = $region3
    $region8: #{tpu_custom_call.1} parent=1 // loop_exit
      _
    %373 = vsyncpa [#allocation3], 1
    %s374 = scalar_lea.sflag [#allocation3], 1
    %375 = vsyncpa %s374, 1
    %376 = vsyncpa [#allocation6], 1
    %s377 = scalar_lea.sflag [#allocation6], 1
    %378 = vsyncpa %s377, 1
    %379 = vsyncpa [#allocation4], 1
    %s380 = scalar_lea.sflag [#allocation4], 1
    %381 = vsyncpa %s380, 1

</llo_original>
